<compile_context>
chip_gen: v7x
topology: tpu7x:2x2x1
jax: 0.10.0
libtpu: 0.0.40
codegen_flags: <defaults>
</compile_context>

<pallas_src>
import jax
import jax.numpy as jnp
from jax.experimental import pallas as pl
from jax.experimental.pallas import tpu as pltpu

_LANES = 128            # vreg lane width
_SUBLANES = 8           # f32 sublanes per vreg
_MAX_TILE_ROWS = 4096   # (4096, 128) f32 = 2 MiB per block


def _round_up(a, b):
    return ((a + b - 1) // b) * b


def _linear_kernel(x_ref, wb_ref, o_ref):
    # y = x * W[0,0] + b[0]  -- scalar broadcast FMA on the VPU.
    w = wb_ref[0]
    b = wb_ref[1]
    o_ref[...] = x_ref[...] * w + b


@jax.jit
def linear_regression_forward(x, weight, bias):
    """x: (N, 1) float32, weight: (1, 1) float32, bias: (1,) float32 -> (N, 1)."""
    n = x.shape[0]
    total = n  # N * 1 elements

    # Weight + bias as one flat SMEM vector: wb = [W[0,0], b[0]].
    wb = jnp.concatenate(
        [weight.reshape(-1), bias.reshape(-1)]).astype(jnp.float32)

    # ---- lane-dense slab with minimal padding ----
    # rows is only rounded up to a multiple of 8 sublanes (<= 1023 pad elems).
    rows = _round_up(pl.cdiv(total, _LANES), _SUBLANES)
    padded_total = rows * _LANES
    pad = padded_total - total

    x_flat = x.reshape(-1).astype(jnp.float32)
    if pad:
        x_flat = jnp.pad(x_flat, (0, pad))
    x2d = x_flat.reshape(rows, _LANES)   # free bitcast when pad == 0

    # ---- tile selection ----
    # Large blocks for HBM-streaming efficiency, but keep >= 2 grid steps when
    # possible so v7x's two TensorCores both get work. Last block may be
    # partial (grid uses cdiv); Pallas masks the boundary writes.
    tile_rows = min(_MAX_TILE_ROWS, rows)
    if tile_rows == rows and rows >= 2 * _SUBLANES:
        tile_rows = _round_up(rows // 2, _SUBLANES)
    grid = (pl.cdiv(rows, tile_rows),)

    extra_kwargs = {}
    if pad:
        # x2d is a fresh padded temporary -> reuse its HBM buffer as the output.
        extra_kwargs["input_output_aliases"] = {0: 0}

    out2d = pl.pallas_call(
        _linear_kernel,
        out_shape=jax.ShapeDtypeStruct((rows, _LANES), jnp.float32),
        grid=grid,
        in_specs=[
            pl.BlockSpec((tile_rows, _LANES), lambda i: (i, 0)),    # lane-dense x tile
            pl.BlockSpec(memory_space=pltpu.MemorySpace.SMEM),      # [w, b] scalars
        ],
        out_specs=pl.BlockSpec((tile_rows, _LANES), lambda i: (i, 0)),
        compiler_params=pltpu.CompilerParams(
            dimension_semantics=("parallel",),   # megacore sharding on v7x
        ),
        **extra_kwargs,
    )(x2d, wb)

    # Restore the (N, 1) PyTorch layout (slice only if we actually padded).
    out_flat = out2d.reshape(-1)
    if pad:
        out_flat = out_flat[:total]
    return out_flat.reshape(n, 1)


if __name__ == "__main__":
    key = jax.random.PRNGKey(0)
    kx, kw, kb = jax.random.split(key, 3)

    # Deterministic parameter init (PyTorch nn.Linear(1,1) uses U(-1, 1) for fan_in=1).
    weight = jax.random.uniform(kw, (1, 1), minval=-1.0, maxval=1.0, dtype=jnp.float32)
    bias = jax.random.uniform(kb, (1,), minval=-1.0, maxval=1.0, dtype=jnp.float32)

    def check(n):
        x = jax.random.normal(kx, (n, 1), dtype=jnp.float32)
        y = jax.block_until_ready(linear_regression_forward(x, weight, bias))
        y_ref = x @ weight.T + bias
        assert y.shape == (n, 1), f"shape mismatch at N={n}"
        assert jnp.allclose(y, y_ref, atol=1e-6), f"mismatch vs reference at N={n}"

    # Small correctness/runnability checks (kernel launch is pure overhead at
    # these sizes; the tiling logic targets large N):
    check(8)      # tiny batch, single 8-row tile
    check(300)    # ragged N -> pad + slice path, aliased output
    check(1024)   # exact (8, 128) fill -> no pad, no slice, no alias
    check(3000)   # 24 rows -> 2 grid steps with a partial last block

    print("KERNEL_OK")
</pallas_src>

<mosaic_0001>
module attributes {stable_mosaic.version = 11 : i64} {
  func.func @_linear_kernel(%arg0: i32, %arg1: memref<8x128xf32, #tpu.memory_space<vmem>>, %arg2: memref<2xf32, #tpu.memory_space<smem>>, %arg3: memref<8x128xf32, #tpu.memory_space<vmem>>) attributes {dimension_semantics = [#tpu.dimension_semantics<parallel>], iteration_bounds = array<i64: 1>, scalar_prefetch = 0 : i64, scratch_operands = 0 : i64, tpu.core_type = #tpu.core_type<tc>, window_params = [{transform_indices = @transform_0, window_bounds = array<i64: 8, 128>}, {transform_indices = @transform_1, window_bounds = array<i64: 2>}, {transform_indices = @transform_2, window_bounds = array<i64: 8, 128>}]} {
    %c0 = arith.constant 0 : index
    %0 = memref.load %arg2[%c0] : memref<2xf32, #tpu.memory_space<smem>>
    %c1 = arith.constant 1 : index
    %1 = memref.load %arg2[%c1] : memref<2xf32, #tpu.memory_space<smem>>
    %c0_0 = arith.constant 0 : index
    %c0_1 = arith.constant 0 : index
    %2 = vector.load %arg1[%c0_0, %c0_1] : memref<8x128xf32, #tpu.memory_space<vmem>>, vector<8x128xf32>
    %3 = vector.broadcast %0 : f32 to vector<8x128xf32>
    %4 = arith.mulf %2, %3 : vector<8x128xf32>
    %5 = vector.broadcast %1 : f32 to vector<8x128xf32>
    %6 = arith.addf %4, %5 : vector<8x128xf32>
    %c0_2 = arith.constant 0 : index
    %c0_3 = arith.constant 0 : index
    %7 = vector.load %arg3[%c0_2, %c0_3] : memref<8x128xf32, #tpu.memory_space<vmem>>, vector<8x128xf32>
    tpu.vector_store %arg3[%c0_2, %c0_3], %6 {strides = array<i32>} : memref<8x128xf32, #tpu.memory_space<vmem>>, vector<8x128xf32>,
    return
  }
  func.func @transform_0(%arg0: i32) -> (i32, i32) {
    %c0_i32 = arith.constant 0 : i32
    %c0_i32_0 = arith.constant 0 : i32
    return %arg0, %c0_i32 : i32, i32
  }
  func.func @transform_1(%arg0: i32) -> i32 {
    %c0_i32 = arith.constant 0 : i32
    %c0_i32_0 = arith.constant 0 : i32
    return %c0_i32 : i32
  }
  func.func @transform_2(%arg0: i32) -> (i32, i32) {
    %c0_i32 = arith.constant 0 : i32
    %c0_i32_0 = arith.constant 0 : i32
    return %arg0, %c0_i32 : i32, i32
  }
}

</mosaic_0001>

<llo_original>
// kernel: linear_regression_forward.1
$region0: #{linear_regression_forward.1}
  #allocation0 [shape = 'u32[]', space=smem, size = 0x4, offset = 0x4, fixed_abs, tag = 'smem constant byte address 0x4 - core index']
  #allocation1 [shape = 'u32[144,128]{1,0:T(1,128)}', space=vmem, size = 0x12000, scoped, tag = 'internal scratch']
  %s0 = inlined_call_operand.vmem [shape: f32[8,128], index: 0, kind: input, shape index: {}, may-alias: {0,2}]
  %s1 = inlined_call_operand.vmem [shape: f32[2], index: 1, kind: input, shape index: {}]
  %s2 = inlined_call_operand.vmem [shape: f32[8,128], index: 2, kind: output, shape index: {}, may-alias: {0,2}]
  %s3 = sld [smem:[#allocation0]]
  $region22: #{linear_regression_forward.1} parent=0
    _
  %s5 = ssub.s32 1, %s3
  %s6 = scalar_select 0, %s5, %s3
  $region1: #{linear_regression_forward.1} parent=0
    #allocation2 [shape = 'u8[512]{0}', space=smem, size = 0x200, scoped, tag = 'input window, operand 1, single buffered']
    #allocation3 [shape = 's32[1]{0}', space=sflag, size = 0x4, scoped, tag = 'scoped memory for linear_regression_forward.1']
    %7 = vsyncpa [#allocation3], 0
    // Predicated region
    $region2: #{linear_regression_forward.1} parent=1 // pred_check
      _
    $region3: #{linear_regression_forward.1} parent=1 // pred_check_branch
      %9 = sbr.rel (0) target = $region5
    $region4: #{linear_regression_forward.1} parent=1 // pred_region
      _
    $region5: #{linear_regression_forward.1} parent=1 // pred_fallthru
      _
    // Predicated region
    $region6: #{linear_regression_forward.1} parent=1 // pred_check
      _
    $region7: #{linear_regression_forward.1} parent=1 // pred_check_branch
      %11 = sbr.rel (0) target = $region9
    $region8: #{linear_regression_forward.1} parent=1 // pred_region
      %s13 = ssub.s32 16, 16
      %14 = vsyncadd [#allocation3], %s13
      %s16 = sshll.u32 %s1, 4
      %s17 = int_to_ptr.vmem [resolvable:$true] %s16
      %19 = dma.vmem_to_smem %s17, 16, [#allocation2], [#allocation3]
    $region9: #{linear_regression_forward.1} parent=1 // pred_fallthru
      _
    // Predicated region
    $region10: #{linear_regression_forward.1} parent=1 // pred_check
      _
    $region11: #{linear_regression_forward.1} parent=1 // pred_check_branch
      %21 = sbr.rel (0) target = $region13
    $region12: #{linear_regression_forward.1} parent=1 // pred_region
      %22 = dma.done [#allocation3], 16
    $region13: #{linear_regression_forward.1} parent=1 // pred_fallthru
      _
    %23 = sfence
    %s24 = sld [smem:[#allocation2]]
    %s25 = sld [smem:[#allocation2 + $0x1]]
    %v26 = vld [vmem:[%s0] sm:$0xff]
    %v27 = vstv %s24
    %v28 = vmul.f32 %v26, %v27
    %v29 = vstv %s25
    %v30 = vadd.f32 %v28, %v29
    %31 = vst [vmem:[%s2] sm:$0xff] %v30
    // Predicated region
    $region14: #{linear_regression_forward.1} parent=1 // pred_check
      _
    $region15: #{linear_regression_forward.1} parent=1 // pred_check_branch
      %33 = sbr.rel (0) target = $region17
    $region16: #{linear_regression_forward.1} parent=1 // pred_region
      _
    $region17: #{linear_regression_forward.1} parent=1 // pred_fallthru
      _
    // Predicated region
    $region18: #{linear_regression_forward.1} parent=1 // pred_check
      _
    $region19: #{linear_regression_forward.1} parent=1 // pred_check_branch
      %35 = sbr.rel (0) target = $region21
    $region20: #{linear_regression_forward.1} parent=1 // pred_region
      _
    $region21: #{linear_regression_forward.1} parent=1 // pred_fallthru
      _
    %36 = vsyncpa [#allocation3], 1

</llo_original>
